<compile_context>
chip_gen: v7x
topology: tpu7x:2x2x1
jax: 0.10.0
libtpu: 0.0.40
codegen_flags: <defaults>
</compile_context>

<pallas_src>
import jax
import jax.numpy as jnp
from jax.experimental import pallas as pl
from jax.experimental.pallas import tpu as pltpu

# --- model hyperparameters (from the PyTorch module) -------------------------
INPUT_SIZE = 6
HIDDEN_SIZE = 6
NUM_HIDDEN_LAYERS = 10          # 1 input layer + 9 more hidden layers
NUM_OUTPUTS = 3                 # ['Emittance', 'Beam Energy', 'Beam Spread']
BN_EPS = 1e-5

# --- TPU-friendly padded sizes ------------------------------------------------
F_SUB = 16                      # feature (sublane) padding for activations/weights
O_SUB = 8                       # output feature (sublane) padding
LANE = 128                      # batch (lane) padding granularity
TB_MAX = 2048                   # max batch lanes per grid tile


def _cdiv(a, b):
    return -(-a // b)


def _pad_up(n, m):
    return _cdiv(n, m) * m


# ------------------------------------------------------------------------------
# Pallas kernel: whole MLP stack on one resident (16, TB) activation tile.
# ------------------------------------------------------------------------------
def mlp_kernel(x_ref, w_ref, s_ref, wout_ref, sout_ref, o_ref):
    h = x_ref[...]                                            # (F_SUB, TB) f32
    # 10 x (Linear with folded BN/bias + ReLU); Dropout is identity in eval.
    # Static unroll so the LLO scheduler interleaves MXU pushes with the
    # previous layer's VPU add/ReLU.
    for i in range(NUM_HIDDEN_LAYERS):
        z = jnp.dot(w_ref[i], h, preferred_element_type=jnp.float32)
        h = jnp.maximum(z + s_ref[i], 0.0)                    # (F_SUB, TB)
    out = jnp.dot(wout_ref[...], h, preferred_element_type=jnp.float32)
    o_ref[...] = out + sout_ref[...]                          # (O_SUB, TB)


def mlp_forward_pallas(x_t, w_stack, shift_stack, w_out, shift_out, tb):
    bpad = x_t.shape[1]
    grid = (bpad // tb,)
    return pl.pallas_call(
        mlp_kernel,
        out_shape=jax.ShapeDtypeStruct((O_SUB, bpad), jnp.float32),
        grid_spec=pltpu.PrefetchScalarGridSpec(
            num_scalar_prefetch=0,
            grid=grid,
            in_specs=[
                pl.BlockSpec((F_SUB, tb), lambda i: (0, i)),               # x
                pl.BlockSpec((NUM_HIDDEN_LAYERS, F_SUB, F_SUB),
                             lambda i: (0, 0, 0)),                         # W^T
                pl.BlockSpec((NUM_HIDDEN_LAYERS, F_SUB, 1),
                             lambda i: (0, 0, 0)),                         # shift
                pl.BlockSpec((O_SUB, F_SUB), lambda i: (0, 0)),            # W_out^T
                pl.BlockSpec((O_SUB, 1), lambda i: (0, 0)),                # shift_out
            ],
            out_specs=pl.BlockSpec((O_SUB, tb), lambda i: (0, i)),
        ),
        compiler_params=pltpu.CompilerParams(
            dimension_semantics=("parallel",)),
    )(x_t, w_stack, shift_stack, w_out, shift_out)


# ------------------------------------------------------------------------------
# Deterministic parameter construction (PyTorch-default-style init),
# with BatchNorm (eval, default buffers) and bias folded into weight/shift,
# stored pre-transposed for the batch-in-lanes layout.
# ------------------------------------------------------------------------------
def init_params(key):
    ks = jax.random.split(key, 2 * (NUM_HIDDEN_LAYERS + 1))

    def linear_init(kw, kb, fan_in, fan_out):
        bound = 1.0 / jnp.sqrt(float(fan_in))
        w = jax.random.uniform(kw, (fan_in, fan_out), jnp.float32, -bound, bound)
        b = jax.random.uniform(kb, (fan_out,), jnp.float32, -bound, bound)
        return w, b

    w_stack = jnp.zeros((NUM_HIDDEN_LAYERS, F_SUB, F_SUB), jnp.float32)
    shift_stack = jnp.zeros((NUM_HIDDEN_LAYERS, F_SUB, 1), jnp.float32)

    for i in range(NUM_HIDDEN_LAYERS):
        fan_in = INPUT_SIZE if i == 0 else HIDDEN_SIZE
        w, b = linear_init(ks[2 * i], ks[2 * i + 1], fan_in, HIDDEN_SIZE)
        # BatchNorm1d eval with default buffers/affine:
        # gamma=1, beta=0, running_mean=0, running_var=1
        gamma = jnp.ones((HIDDEN_SIZE,), jnp.float32)
        beta = jnp.zeros((HIDDEN_SIZE,), jnp.float32)
        run_mean = jnp.zeros((HIDDEN_SIZE,), jnp.float32)
        run_var = jnp.ones((HIDDEN_SIZE,), jnp.float32)
        scale = gamma / jnp.sqrt(run_var + BN_EPS)            # (H,)
        shift = beta - run_mean * scale                       # (H,)
        w_eff_t = (w * scale[None, :]).T                      # (H, fan_in), BN folded
        shift_eff = b * scale + shift                         # (H,)
        w_stack = w_stack.at[i, :HIDDEN_SIZE, :fan_in].set(w_eff_t)
        shift_stack = shift_stack.at[i, :HIDDEN_SIZE, 0].set(shift_eff)

    w, b = linear_init(ks[-2], ks[-1], HIDDEN_SIZE, NUM_OUTPUTS)
    w_out = jnp.zeros((O_SUB, F_SUB), jnp.float32).at[
        :NUM_OUTPUTS, :HIDDEN_SIZE].set(w.T)
    shift_out = jnp.zeros((O_SUB, 1), jnp.float32).at[:NUM_OUTPUTS, 0].set(b)

    return w_stack, shift_stack, w_out, shift_out


def _choose_tiling(batch):
    """Pick (padded batch, lane-tile) sizes.

    - pad batch only to a 128-lane multiple (plus tile alignment), never to
      a blind TB_MAX multiple;
    - guarantee >=2 grid tiles when bpad >= 256 so v7x megacore shards
      across both TensorCores;
    - cap tiles at TB_MAX lanes to amortize per-step overhead on v5e/v6e.
    """
    bpad = _pad_up(batch, LANE)
    if bpad <= LANE:
        return bpad, bpad
    ntiles = max(2, _cdiv(bpad, TB_MAX))
    tb = min(TB_MAX, _pad_up(_cdiv(bpad, ntiles), LANE))
    return _pad_up(bpad, tb), tb


@jax.jit
def neural_network_forward(x, w_stack, shift_stack, w_out, shift_out):
    """x: (batch, 6) float32 -> logits (batch, 3) float32."""
    batch = x.shape[0]
    bpad, tb = _choose_tiling(batch)
    # features -> sublanes (6 padded to 16), batch -> lanes (padded to bpad)
    x_t = jnp.pad(x.astype(jnp.float32).T,
                  ((0, F_SUB - INPUT_SIZE), (0, bpad - batch)))
    out_t = mlp_forward_pallas(x_t, w_stack, shift_stack, w_out, shift_out, tb)
    return out_t[:NUM_OUTPUTS, :batch].T


# Plain-JAX reference (mirrors the kernel math exactly) for a sanity check.
def reference_forward(x, w_stack, shift_stack, w_out, shift_out):
    h = jnp.pad(x.astype(jnp.float32).T, ((0, F_SUB - INPUT_SIZE), (0, 0)))
    for i in range(NUM_HIDDEN_LAYERS):
        h = jnp.maximum(jnp.dot(w_stack[i], h) + shift_stack[i], 0.0)
    out = jnp.dot(w_out, h) + shift_out
    return out[:NUM_OUTPUTS, :].T


if __name__ == "__main__":
    key = jax.random.PRNGKey(0)
    k_params, k_x = jax.random.split(key)

    params = init_params(k_params)
    batch = 8
    x = jax.random.normal(k_x, (batch, INPUT_SIZE), jnp.float32)

    logits = neural_network_forward(x, *params)
    logits = jax.block_until_ready(logits)

    ref = reference_forward(x, *params)
    assert logits.shape == (batch, NUM_OUTPUTS)
    assert jnp.allclose(logits, ref, atol=1e-3, rtol=1e-3), (
        float(jnp.max(jnp.abs(logits - ref))))

    print("KERNEL_OK")
</pallas_src>

<mosaic_0001>
module attributes {stable_mosaic.version = 11 : i64} {
  func.func @mlp_kernel(%arg0: i32, %arg1: memref<16x128xf32, #tpu.memory_space<vmem>>, %arg2: memref<10x16x16xf32, #tpu.memory_space<vmem>>, %arg3: memref<10x16x1xf32, #tpu.memory_space<vmem>>, %arg4: memref<8x16xf32, #tpu.memory_space<vmem>>, %arg5: memref<8x1xf32, #tpu.memory_space<vmem>>, %arg6: memref<8x128xf32, #tpu.memory_space<vmem>>) attributes {dimension_semantics = [#tpu.dimension_semantics<parallel>], iteration_bounds = array<i64: 1>, scalar_prefetch = 0 : i64, scratch_operands = 0 : i64, tpu.core_type = #tpu.core_type<tc>, window_params = [{transform_indices = @transform_0, window_bounds = array<i64: 16, 128>}, {pipeline_mode = #tpu.pipeline_mode<synchronous>, transform_indices = @transform_1, window_bounds = array<i64: 10, 16, 16>}, {pipeline_mode = #tpu.pipeline_mode<synchronous>, transform_indices = @transform_2, window_bounds = array<i64: 10, 16, 1>}, {pipeline_mode = #tpu.pipeline_mode<synchronous>, transform_indices = @transform_3, window_bounds = array<i64: 8, 16>}, {pipeline_mode = #tpu.pipeline_mode<synchronous>, transform_indices = @transform_4, window_bounds = array<i64: 8, 1>}, {transform_indices = @transform_5, window_bounds = array<i64: 8, 128>}]} {
    %c0 = arith.constant 0 : index
    %c0_0 = arith.constant 0 : index
    %0 = vector.load %arg1[%c0, %c0_0] : memref<16x128xf32, #tpu.memory_space<vmem>>, vector<16x128xf32>
    %c0_1 = arith.constant 0 : index
    %c0_2 = arith.constant 0 : index
    %c0_3 = arith.constant 0 : index
    %1 = vector.load %arg2[%c0_1, %c0_2, %c0_3] : memref<10x16x16xf32, #tpu.memory_space<vmem>>, vector<1x16x16xf32>
    %2 = vector.shape_cast %1 : vector<1x16x16xf32> to vector<16x16xf32>
    %cst = arith.constant dense<0.000000e+00> : vector<16x128xf32>
    %3 = tpu.matmul %2, %0, %cst {dimension_numbers = #tpu.dot_dimension_numbers<[1], [0], [0], [1], [0, 0, 1, 1], [], []>} : vector<16x16xf32>, vector<16x128xf32>, vector<16x128xf32> -> vector<16x128xf32>
    %c0_4 = arith.constant 0 : index
    %c0_5 = arith.constant 0 : index
    %c0_6 = arith.constant 0 : index
    %4 = vector.load %arg3[%c0_4, %c0_5, %c0_6] : memref<10x16x1xf32, #tpu.memory_space<vmem>>, vector<1x16x1xf32>
    %5 = vector.shape_cast %4 : vector<1x16x1xf32> to vector<16x1xf32>
    %6 = vector.broadcast %5 : vector<16x1xf32> to vector<16x128xf32>
    %7 = arith.addf %3, %6 : vector<16x128xf32>
    %cst_7 = arith.constant 0.000000e+00 : f32
    %8 = vector.broadcast %cst_7 : f32 to vector<16x128xf32>
    %9 = arith.maximumf %7, %8 : vector<16x128xf32>
    %c1 = arith.constant 1 : index
    %c0_8 = arith.constant 0 : index
    %c0_9 = arith.constant 0 : index
    %10 = vector.load %arg2[%c1, %c0_8, %c0_9] : memref<10x16x16xf32, #tpu.memory_space<vmem>>, vector<1x16x16xf32>
    %11 = vector.shape_cast %10 : vector<1x16x16xf32> to vector<16x16xf32>
    %cst_10 = arith.constant dense<0.000000e+00> : vector<16x128xf32>
    %12 = tpu.matmul %11, %9, %cst_10 {dimension_numbers = #tpu.dot_dimension_numbers<[1], [0], [0], [1], [0, 0, 1, 1], [], []>} : vector<16x16xf32>, vector<16x128xf32>, vector<16x128xf32> -> vector<16x128xf32>
    %c1_11 = arith.constant 1 : index
    %c0_12 = arith.constant 0 : index
    %c0_13 = arith.constant 0 : index
    %13 = vector.load %arg3[%c1_11, %c0_12, %c0_13] : memref<10x16x1xf32, #tpu.memory_space<vmem>>, vector<1x16x1xf32>
    %14 = vector.shape_cast %13 : vector<1x16x1xf32> to vector<16x1xf32>
    %15 = vector.broadcast %14 : vector<16x1xf32> to vector<16x128xf32>
    %16 = arith.addf %12, %15 : vector<16x128xf32>
    %cst_14 = arith.constant 0.000000e+00 : f32
    %17 = vector.broadcast %cst_14 : f32 to vector<16x128xf32>
    %18 = arith.maximumf %16, %17 : vector<16x128xf32>
    %c2 = arith.constant 2 : index
    %c0_15 = arith.constant 0 : index
    %c0_16 = arith.constant 0 : index
    %19 = vector.load %arg2[%c2, %c0_15, %c0_16] : memref<10x16x16xf32, #tpu.memory_space<vmem>>, vector<1x16x16xf32>
    %20 = vector.shape_cast %19 : vector<1x16x16xf32> to vector<16x16xf32>
    %cst_17 = arith.constant dense<0.000000e+00> : vector<16x128xf32>
    %21 = tpu.matmul %20, %18, %cst_17 {dimension_numbers = #tpu.dot_dimension_numbers<[1], [0], [0], [1], [0, 0, 1, 1], [], []>} : vector<16x16xf32>, vector<16x128xf32>, vector<16x128xf32> -> vector<16x128xf32>
    %c2_18 = arith.constant 2 : index
    %c0_19 = arith.constant 0 : index
    %c0_20 = arith.constant 0 : index
    %22 = vector.load %arg3[%c2_18, %c0_19, %c0_20] : memref<10x16x1xf32, #tpu.memory_space<vmem>>, vector<1x16x1xf32>
    %23 = vector.shape_cast %22 : vector<1x16x1xf32> to vector<16x1xf32>
    %24 = vector.broadcast %23 : vector<16x1xf32> to vector<16x128xf32>
    %25 = arith.addf %21, %24 : vector<16x128xf32>
    %cst_21 = arith.constant 0.000000e+00 : f32
    %26 = vector.broadcast %cst_21 : f32 to vector<16x128xf32>
    %27 = arith.maximumf %25, %26 : vector<16x128xf32>
    %c3 = arith.constant 3 : index
    %c0_22 = arith.constant 0 : index
    %c0_23 = arith.constant 0 : index
    %28 = vector.load %arg2[%c3, %c0_22, %c0_23] : memref<10x16x16xf32, #tpu.memory_space<vmem>>, vector<1x16x16xf32>
    %29 = vector.shape_cast %28 : vector<1x16x16xf32> to vector<16x16xf32>
    %cst_24 = arith.constant dense<0.000000e+00> : vector<16x128xf32>
    %30 = tpu.matmul %29, %27, %cst_24 {dimension_numbers = #tpu.dot_dimension_numbers<[1], [0], [0], [1], [0, 0, 1, 1], [], []>} : vector<16x16xf32>, vector<16x128xf32>, vector<16x128xf32> -> vector<16x128xf32>
    %c3_25 = arith.constant 3 : index
    %c0_26 = arith.constant 0 : index
    %c0_27 = arith.constant 0 : index
    %31 = vector.load %arg3[%c3_25, %c0_26, %c0_27] : memref<10x16x1xf32, #tpu.memory_space<vmem>>, vector<1x16x1xf32>
    %32 = vector.shape_cast %31 : vector<1x16x1xf32> to vector<16x1xf32>
    %33 = vector.broadcast %32 : vector<16x1xf32> to vector<16x128xf32>
    %34 = arith.addf %30, %33 : vector<16x128xf32>
    %cst_28 = arith.constant 0.000000e+00 : f32
    %35 = vector.broadcast %cst_28 : f32 to vector<16x128xf32>
    %36 = arith.maximumf %34, %35 : vector<16x128xf32>
    %c4 = arith.constant 4 : index
    %c0_29 = arith.constant 0 : index
    %c0_30 = arith.constant 0 : index
    %37 = vector.load %arg2[%c4, %c0_29, %c0_30] : memref<10x16x16xf32, #tpu.memory_space<vmem>>, vector<1x16x16xf32>
    %38 = vector.shape_cast %37 : vector<1x16x16xf32> to vector<16x16xf32>
    %cst_31 = arith.constant dense<0.000000e+00> : vector<16x128xf32>
    %39 = tpu.matmul %38, %36, %cst_31 {dimension_numbers = #tpu.dot_dimension_numbers<[1], [0], [0], [1], [0, 0, 1, 1], [], []>} : vector<16x16xf32>, vector<16x128xf32>, vector<16x128xf32> -> vector<16x128xf32>
    %c4_32 = arith.constant 4 : index
    %c0_33 = arith.constant 0 : index
    %c0_34 = arith.constant 0 : index
    %40 = vector.load %arg3[%c4_32, %c0_33, %c0_34] : memref<10x16x1xf32, #tpu.memory_space<vmem>>, vector<1x16x1xf32>
    %41 = vector.shape_cast %40 : vector<1x16x1xf32> to vector<16x1xf32>
    %42 = vector.broadcast %41 : vector<16x1xf32> to vector<16x128xf32>
    %43 = arith.addf %39, %42 : vector<16x128xf32>
    %cst_35 = arith.constant 0.000000e+00 : f32
    %44 = vector.broadcast %cst_35 : f32 to vector<16x128xf32>
    %45 = arith.maximumf %43, %44 : vector<16x128xf32>
    %c5 = arith.constant 5 : index
    %c0_36 = arith.constant 0 : index
    %c0_37 = arith.constant 0 : index
    %46 = vector.load %arg2[%c5, %c0_36, %c0_37] : memref<10x16x16xf32, #tpu.memory_space<vmem>>, vector<1x16x16xf32>
    %47 = vector.shape_cast %46 : vector<1x16x16xf32> to vector<16x16xf32>
    %cst_38 = arith.constant dense<0.000000e+00> : vector<16x128xf32>
    %48 = tpu.matmul %47, %45, %cst_38 {dimension_numbers = #tpu.dot_dimension_numbers<[1], [0], [0], [1], [0, 0, 1, 1], [], []>} : vector<16x16xf32>, vector<16x128xf32>, vector<16x128xf32> -> vector<16x128xf32>
    %c5_39 = arith.constant 5 : index
    %c0_40 = arith.constant 0 : index
    %c0_41 = arith.constant 0 : index
    %49 = vector.load %arg3[%c5_39, %c0_40, %c0_41] : memref<10x16x1xf32, #tpu.memory_space<vmem>>, vector<1x16x1xf32>
    %50 = vector.shape_cast %49 : vector<1x16x1xf32> to vector<16x1xf32>
    %51 = vector.broadcast %50 : vector<16x1xf32> to vector<16x128xf32>
    %52 = arith.addf %48, %51 : vector<16x128xf32>
    %cst_42 = arith.constant 0.000000e+00 : f32
    %53 = vector.broadcast %cst_42 : f32 to vector<16x128xf32>
    %54 = arith.maximumf %52, %53 : vector<16x128xf32>
    %c6 = arith.constant 6 : index
    %c0_43 = arith.constant 0 : index
    %c0_44 = arith.constant 0 : index
    %55 = vector.load %arg2[%c6, %c0_43, %c0_44] : memref<10x16x16xf32, #tpu.memory_space<vmem>>, vector<1x16x16xf32>
    %56 = vector.shape_cast %55 : vector<1x16x16xf32> to vector<16x16xf32>
    %cst_45 = arith.constant dense<0.000000e+00> : vector<16x128xf32>
    %57 = tpu.matmul %56, %54, %cst_45 {dimension_numbers = #tpu.dot_dimension_numbers<[1], [0], [0], [1], [0, 0, 1, 1], [], []>} : vector<16x16xf32>, vector<16x128xf32>, vector<16x128xf32> -> vector<16x128xf32>
    %c6_46 = arith.constant 6 : index
    %c0_47 = arith.constant 0 : index
    %c0_48 = arith.constant 0 : index
    %58 = vector.load %arg3[%c6_46, %c0_47, %c0_48] : memref<10x16x1xf32, #tpu.memory_space<vmem>>, vector<1x16x1xf32>
    %59 = vector.shape_cast %58 : vector<1x16x1xf32> to vector<16x1xf32>
    %60 = vector.broadcast %59 : vector<16x1xf32> to vector<16x128xf32>
    %61 = arith.addf %57, %60 : vector<16x128xf32>
    %cst_49 = arith.constant 0.000000e+00 : f32
    %62 = vector.broadcast %cst_49 : f32 to vector<16x128xf32>
    %63 = arith.maximumf %61, %62 : vector<16x128xf32>
    %c7 = arith.constant 7 : index
    %c0_50 = arith.constant 0 : index
    %c0_51 = arith.constant 0 : index
    %64 = vector.load %arg2[%c7, %c0_50, %c0_51] : memref<10x16x16xf32, #tpu.memory_space<vmem>>, vector<1x16x16xf32>
    %65 = vector.shape_cast %64 : vector<1x16x16xf32> to vector<16x16xf32>
    %cst_52 = arith.constant dense<0.000000e+00> : vector<16x128xf32>
    %66 = tpu.matmul %65, %63, %cst_52 {dimension_numbers = #tpu.dot_dimension_numbers<[1], [0], [0], [1], [0, 0, 1, 1], [], []>} : vector<16x16xf32>, vector<16x128xf32>, vector<16x128xf32> -> vector<16x128xf32>
    %c7_53 = arith.constant 7 : index
    %c0_54 = arith.constant 0 : index
    %c0_55 = arith.constant 0 : index
    %67 = vector.load %arg3[%c7_53, %c0_54, %c0_55] : memref<10x16x1xf32, #tpu.memory_space<vmem>>, vector<1x16x1xf32>
    %68 = vector.shape_cast %67 : vector<1x16x1xf32> to vector<16x1xf32>
    %69 = vector.broadcast %68 : vector<16x1xf32> to vector<16x128xf32>
    %70 = arith.addf %66, %69 : vector<16x128xf32>
    %cst_56 = arith.constant 0.000000e+00 : f32
    %71 = vector.broadcast %cst_56 : f32 to vector<16x128xf32>
    %72 = arith.maximumf %70, %71 : vector<16x128xf32>
    %c8 = arith.constant 8 : index
    %c0_57 = arith.constant 0 : index
    %c0_58 = arith.constant 0 : index
    %73 = vector.load %arg2[%c8, %c0_57, %c0_58] : memref<10x16x16xf32, #tpu.memory_space<vmem>>, vector<1x16x16xf32>
    %74 = vector.shape_cast %73 : vector<1x16x16xf32> to vector<16x16xf32>
    %cst_59 = arith.constant dense<0.000000e+00> : vector<16x128xf32>
    %75 = tpu.matmul %74, %72, %cst_59 {dimension_numbers = #tpu.dot_dimension_numbers<[1], [0], [0], [1], [0, 0, 1, 1], [], []>} : vector<16x16xf32>, vector<16x128xf32>, vector<16x128xf32> -> vector<16x128xf32>
    %c8_60 = arith.constant 8 : index
    %c0_61 = arith.constant 0 : index
    %c0_62 = arith.constant 0 : index
    %76 = vector.load %arg3[%c8_60, %c0_61, %c0_62] : memref<10x16x1xf32, #tpu.memory_space<vmem>>, vector<1x16x1xf32>
    %77 = vector.shape_cast %76 : vector<1x16x1xf32> to vector<16x1xf32>
    %78 = vector.broadcast %77 : vector<16x1xf32> to vector<16x128xf32>
    %79 = arith.addf %75, %78 : vector<16x128xf32>
    %cst_63 = arith.constant 0.000000e+00 : f32
    %80 = vector.broadcast %cst_63 : f32 to vector<16x128xf32>
    %81 = arith.maximumf %79, %80 : vector<16x128xf32>
    %c9 = arith.constant 9 : index
    %c0_64 = arith.constant 0 : index
    %c0_65 = arith.constant 0 : index
    %82 = vector.load %arg2[%c9, %c0_64, %c0_65] : memref<10x16x16xf32, #tpu.memory_space<vmem>>, vector<1x16x16xf32>
    %83 = vector.shape_cast %82 : vector<1x16x16xf32> to vector<16x16xf32>
    %cst_66 = arith.constant dense<0.000000e+00> : vector<16x128xf32>
    %84 = tpu.matmul %83, %81, %cst_66 {dimension_numbers = #tpu.dot_dimension_numbers<[1], [0], [0], [1], [0, 0, 1, 1], [], []>} : vector<16x16xf32>, vector<16x128xf32>, vector<16x128xf32> -> vector<16x128xf32>
    %c9_67 = arith.constant 9 : index
    %c0_68 = arith.constant 0 : index
    %c0_69 = arith.constant 0 : index
    %85 = vector.load %arg3[%c9_67, %c0_68, %c0_69] : memref<10x16x1xf32, #tpu.memory_space<vmem>>, vector<1x16x1xf32>
    %86 = vector.shape_cast %85 : vector<1x16x1xf32> to vector<16x1xf32>
    %87 = vector.broadcast %86 : vector<16x1xf32> to vector<16x128xf32>
    %88 = arith.addf %84, %87 : vector<16x128xf32>
    %cst_70 = arith.constant 0.000000e+00 : f32
    %89 = vector.broadcast %cst_70 : f32 to vector<16x128xf32>
    %90 = arith.maximumf %88, %89 : vector<16x128xf32>
    %c0_71 = arith.constant 0 : index
    %c0_72 = arith.constant 0 : index
    %91 = vector.load %arg4[%c0_71, %c0_72] : memref<8x16xf32, #tpu.memory_space<vmem>>, vector<8x16xf32>
    %cst_73 = arith.constant dense<0.000000e+00> : vector<8x128xf32>
    %92 = tpu.matmul %91, %90, %cst_73 {dimension_numbers = #tpu.dot_dimension_numbers<[1], [0], [0], [1], [0, 0, 1, 1], [], []>} : vector<8x16xf32>, vector<16x128xf32>, vector<8x128xf32> -> vector<8x128xf32>
    %c0_74 = arith.constant 0 : index
    %c0_75 = arith.constant 0 : index
    %93 = vector.load %arg5[%c0_74, %c0_75] : memref<8x1xf32, #tpu.memory_space<vmem>>, vector<8x1xf32>
    %94 = vector.broadcast %93 : vector<8x1xf32> to vector<8x128xf32>
    %95 = arith.addf %92, %94 : vector<8x128xf32>
    %c0_76 = arith.constant 0 : index
    %c0_77 = arith.constant 0 : index
    %96 = vector.load %arg6[%c0_76, %c0_77] : memref<8x128xf32, #tpu.memory_space<vmem>>, vector<8x128xf32>
    tpu.vector_store %arg6[%c0_76, %c0_77], %95 {strides = array<i32>} : memref<8x128xf32, #tpu.memory_space<vmem>>, vector<8x128xf32>,
    return
  }
  func.func @transform_0(%arg0: i32) -> (i32, i32) {
    %c0_i32 = arith.constant 0 : i32
    %c0_i32_0 = arith.constant 0 : i32
    return %c0_i32, %arg0 : i32, i32
  }
  func.func @transform_1(%arg0: i32) -> (i32, i32, i32) {
    %c0_i32 = arith.constant 0 : i32
    %c0_i32_0 = arith.constant 0 : i32
    %c0_i32_1 = arith.constant 0 : i32
    %c0_i32_2 = arith.constant 0 : i32
    return %c0_i32, %c0_i32_0, %c0_i32_1 : i32, i32, i32
  }
  func.func @transform_2(%arg0: i32) -> (i32, i32, i32) {
    %c0_i32 = arith.constant 0 : i32
    %c0_i32_0 = arith.constant 0 : i32
    %c0_i32_1 = arith.constant 0 : i32
    %c0_i32_2 = arith.constant 0 : i32
    return %c0_i32, %c0_i32_0, %c0_i32_1 : i32, i32, i32
  }
  func.func @transform_3(%arg0: i32) -> (i32, i32) {
    %c0_i32 = arith.constant 0 : i32
    %c0_i32_0 = arith.constant 0 : i32
    %c0_i32_1 = arith.constant 0 : i32
    return %c0_i32, %c0_i32_0 : i32, i32
  }
  func.func @transform_4(%arg0: i32) -> (i32, i32) {
    %c0_i32 = arith.constant 0 : i32
    %c0_i32_0 = arith.constant 0 : i32
    %c0_i32_1 = arith.constant 0 : i32
    return %c0_i32, %c0_i32_0 : i32, i32
  }
  func.func @transform_5(%arg0: i32) -> (i32, i32) {
    %c0_i32 = arith.constant 0 : i32
    %c0_i32_0 = arith.constant 0 : i32
    return %c0_i32, %arg0 : i32, i32
  }
}

</mosaic_0001>

<llo_original>
// kernel: neural_network_forward.1
$region0: #{neural_network_forward.1}
  #allocation0 [shape = 'u32[]', space=smem, size = 0x4, offset = 0x4, fixed_abs, tag = 'smem constant byte address 0x4 - core index']
  #allocation1 [shape = 'u32[144,128]{1,0:T(1,128)}', space=vmem, size = 0x12000, scoped, tag = 'internal scratch']
  %s0 = inlined_call_operand.vmem [shape: f32[16,128], index: 0, kind: input, shape index: {}]
  %s1 = inlined_call_operand.vmem [shape: f32[10,16,16], index: 1, kind: input, shape index: {}]
  %s2 = inlined_call_operand.vmem [shape: f32[10,16,1], index: 2, kind: input, shape index: {}]
  %s3 = inlined_call_operand.vmem [shape: f32[8,16], index: 3, kind: input, shape index: {}]
  %s4 = inlined_call_operand.vmem [shape: f32[8,1], index: 4, kind: input, shape index: {}]
  %s5 = inlined_call_operand.vmem [shape: f32[8,128], index: 5, kind: output, shape index: {}]
  %s6 = sld [smem:[#allocation0]]
  $region30: #{neural_network_forward.1} parent=0
    _
  %s8 = ssub.s32 1, %s6
  %s9 = scalar_select 0, %s8, %s6
  // Predicated region
  $region2: #{neural_network_forward.1} parent=0 // pred_check
    _
  $region3: #{neural_network_forward.1} parent=0 // pred_check_branch
    %11 = sbr.rel (0) target = $region5
  $region4: #{neural_network_forward.1} parent=0 // pred_region
    _
  $region5: #{neural_network_forward.1} parent=0 // pred_fallthru
    _
  // Predicated region
  $region6: #{neural_network_forward.1} parent=0 // pred_check
    _
  $region7: #{neural_network_forward.1} parent=0 // pred_check_branch
    %13 = sbr.rel (0) target = $region9
  $region8: #{neural_network_forward.1} parent=0 // pred_region
    _
  $region9: #{neural_network_forward.1} parent=0 // pred_fallthru
    _
  // Predicated region
  $region10: #{neural_network_forward.1} parent=0 // pred_check
    _
  $region11: #{neural_network_forward.1} parent=0 // pred_check_branch
    %15 = sbr.rel (0) target = $region13
  $region12: #{neural_network_forward.1} parent=0 // pred_region
    _
  $region13: #{neural_network_forward.1} parent=0 // pred_fallthru
    _
  // Predicated region
  $region14: #{neural_network_forward.1} parent=0 // pred_check
    _
  $region15: #{neural_network_forward.1} parent=0 // pred_check_branch
    %17 = sbr.rel (0) target = $region17
  $region16: #{neural_network_forward.1} parent=0 // pred_region
    _
  $region17: #{neural_network_forward.1} parent=0 // pred_fallthru
    _
  // Predicated region
  $region18: #{neural_network_forward.1} parent=0 // pred_check
    _
  $region19: #{neural_network_forward.1} parent=0 // pred_check_branch
    %19 = sbr.rel (0) target = $region21
  $region20: #{neural_network_forward.1} parent=0 // pred_region
    _
  $region21: #{neural_network_forward.1} parent=0 // pred_fallthru
    _
  %v20 = vld [vmem:[%s0] sm:$0xff]
  %v21 = vld [vmem:[%s0 + $0x8] sm:$0xff]
  %v22 = vld [vmem:[%s1] sm:$0xff]
  %v23 = vld [vmem:[%s1 + $0x8] sm:$0xff]
  %v24 = vld [vmem:[%s2] sm:$0xff]
  %v25 = vld [vmem:[%s2 + $0x8] sm:$0xff]
  %27 = vset.pattern.permute.xlu0 0
  %28 = vperm.xlu0 %27, %v24
  %v29 = vpop.permute.xlu0 %28
  %32 = vset.pattern.permute.xlu0 0
  %33 = vperm.xlu0 %32, %v25
  %v34 = vpop.permute.xlu0 %33
  %vm36 = vcmask 130048
  %v38 = vsel %vm36, %v22, 0
  %v41 = vsel %vm36, %v23, 0
  %43 = vmatprep.subr.mxu0 0.0
  %44 = vmatpush1.msra.mxu0 %v20
  %45 = vmatprep.subr.mxu0 0.0
  %46 = vmatpush1.msra.mxu0 %v21
  %47 = vmatprep.subr.mxu0 0.0
  %48 = vmatpush1.msra.mxu0 0.0
  %49 = vmatprep.subr.mxu0 0.0
  %50 = vmatpush1.msra.mxu0 0.0
  %51 = vmatprep.subr.mxu0 0.0
  %52 = vmatpush1.msra.mxu0 0.0
  %53 = vmatprep.subr.mxu0 0.0
  %54 = vmatpush1.msra.mxu0 0.0
  %55 = vmatprep.subr.mxu0 0.0
  %56 = vmatpush1.msra.mxu0 0.0
  %57 = vmatprep.subr.mxu0 0.0
  %58 = vmatpush1.msra.mxu0 0.0
  %59 = vmatprep.subr.mxu0 0.0
  %60 = vmatpush1.msra.mxu0 0.0
  %61 = vmatprep.subr.mxu0 0.0
  %62 = vmatpush1.msra.mxu0 0.0
  %63 = vmatprep.subr.mxu0 0.0
  %64 = vmatpush1.msra.mxu0 0.0
  %65 = vmatprep.subr.mxu0 0.0
  %66 = vmatpush1.msra.mxu0 0.0
  %67 = vmatprep.subr.mxu0 0.0
  %68 = vmatpush1.msra.mxu0 0.0
  %69 = vmatprep.subr.mxu0 0.0
  %70 = vmatpush1.msra.mxu0 0.0
  %71 = vmatprep.subr.mxu0 0.0
  %72 = vmatpush1.msra.mxu0 0.0
  %73 = vmatprep.subr.mxu0 0.0
  %74 = vmatpush1.msra.mxu0 0.0
  %75 = vmatprep.subr.mxu0 0.0
  %76 = vmatpush1.msra.mxu0 0.0
  %77 = vmatprep.subr.mxu0 0.0
  %78 = vmatpush1.msra.mxu0 0.0
  %79 = vmatprep.subr.mxu0 0.0
  %80 = vmatpush1.msra.mxu0 0.0
  %81 = vmatprep.subr.mxu0 0.0
  %82 = vmatpush1.msra.mxu0 0.0
  %83 = vmatprep.subr.mxu0 0.0
  %84 = vmatpush1.msra.mxu0 0.0
  %85 = vmatprep.subr.mxu0 0.0
  %86 = vmatpush1.msra.mxu0 0.0
  %87 = vmatprep.subr.mxu0 0.0
  %88 = vmatpush1.msra.mxu0 0.0
  %89 = vmatprep.subr.mxu0 0.0
  %90 = vmatpush1.msra.mxu0 0.0
  %91 = vmatprep.subr.mxu0 0.0
  %92 = vmatpush1.msra.mxu0 0.0
  %93 = vmatprep.subr.mxu0 0.0
  %94 = vmatpush1.msra.mxu0 0.0
  %95 = vmatprep.subr.mxu0 0.0
  %96 = vmatpush1.msra.mxu0 0.0
  %97 = vmatprep.subr.mxu0 0.0
  %98 = vmatpush1.msra.mxu0 0.0
  %99 = vmatprep.subr.mxu0 0.0
  %100 = vmatpush1.msra.mxu0 0.0
  %101 = vmatprep.subr.mxu0 0.0
  %102 = vmatpush1.msra.mxu0 0.0
  %103 = vmatprep.subr.mxu0 0.0
  %104 = vmatpush1.msra.mxu0 0.0
  %105 = vmatprep.subr.mxu0 0.0
  %106 = vmatpush1.msra.mxu0 0.0
  %107 = vmatprep.mubr.f32.mxu0 0.0
  %108 = vmatmul.mubr.f32.gmra.mrb[0].mxu0 %v38
  %v109 = vpop.f32.mrb[0].mxu0
  %v110 = vadd.f32 %v29, %v109
  %v111 = vpop.f32.mrb[0].mxu0
  %112 = vmatprep.mubr.f32.mxu0 0.0
  %113 = vmatmul.mubr.f32.gmra.mrb[0].mxu0 %v41
  %v114 = vpop.f32.mrb[0].mxu0
  %v115 = vadd.f32 %v34, %v114
  %v116 = vpop.f32.mrb[0].mxu0
  %117 = vdwg.mxu0
  %v118 = vmax.f32 %v110, 0.0
  %v119 = vmax.f32 %v115, 0.0
  %s120 = scalar_lea.vmem %s1, 16
  %v121 = vld [vmem:[%s120] sm:$0xff]
  %v122 = vld [vmem:[%s120 + $0x8] sm:$0xff]
  %s123 = scalar_lea.vmem %s2, 16
  %v124 = vld [vmem:[%s123] sm:$0xff]
  %v125 = vld [vmem:[%s123 + $0x8] sm:$0xff]
  %127 = vset.pattern.permute.xlu0 0
  %128 = vperm.xlu0 %127, %v124
  %v129 = vpop.permute.xlu0 %128
  %132 = vset.pattern.permute.xlu0 0
  %133 = vperm.xlu0 %132, %v125
  %v134 = vpop.permute.xlu0 %133
  %v137 = vsel %vm36, %v121, 0
  %v140 = vsel %vm36, %v122, 0
  %142 = vmatprep.subr.mxu0 0.0
  %143 = vmatpush1.msra.mxu0 %v118
  %144 = vmatprep.subr.mxu0 0.0
  %145 = vmatpush1.msra.mxu0 %v119
  %146 = vmatprep.subr.mxu0 0.0
  %147 = vmatpush1.msra.mxu0 0.0
  %148 = vmatprep.subr.mxu0 0.0
  %149 = vmatpush1.msra.mxu0 0.0
  %150 = vmatprep.subr.mxu0 0.0
  %151 = vmatpush1.msra.mxu0 0.0
  %152 = vmatprep.subr.mxu0 0.0
  %153 = vmatpush1.msra.mxu0 0.0
  %154 = vmatprep.subr.mxu0 0.0
  %155 = vmatpush1.msra.mxu0 0.0
  %156 = vmatprep.subr.mxu0 0.0
  %157 = vmatpush1.msra.mxu0 0.0
  %158 = vmatprep.subr.mxu0 0.0
  %159 = vmatpush1.msra.mxu0 0.0
  %160 = vmatprep.subr.mxu0 0.0
  %161 = vmatpush1.msra.mxu0 0.0
  %162 = vmatprep.subr.mxu0 0.0
  %163 = vmatpush1.msra.mxu0 0.0
  %164 = vmatprep.subr.mxu0 0.0
  %165 = vmatpush1.msra.mxu0 0.0
  %166 = vmatprep.subr.mxu0 0.0
  %167 = vmatpush1.msra.mxu0 0.0
  %168 = vmatprep.subr.mxu0 0.0
  %169 = vmatpush1.msra.mxu0 0.0
  %170 = vmatprep.subr.mxu0 0.0
  %171 = vmatpush1.msra.mxu0 0.0
  %172 = vmatprep.subr.mxu0 0.0
  %173 = vmatpush1.msra.mxu0 0.0
  %174 = vmatprep.subr.mxu0 0.0
  %175 = vmatpush1.msra.mxu0 0.0
  %176 = vmatprep.subr.mxu0 0.0
  %177 = vmatpush1.msra.mxu0 0.0
  %178 = vmatprep.subr.mxu0 0.0
  %179 = vmatpush1.msra.mxu0 0.0
  %180 = vmatprep.subr.mxu0 0.0
  %181 = vmatpush1.msra.mxu0 0.0
  %182 = vmatprep.subr.mxu0 0.0
  %183 = vmatpush1.msra.mxu0 0.0
  %184 = vmatprep.subr.mxu0 0.0
  %185 = vmatpush1.msra.mxu0 0.0
  %186 = vmatprep.subr.mxu0 0.0
  %187 = vmatpush1.msra.mxu0 0.0
  %188 = vmatprep.subr.mxu0 0.0
  %189 = vmatpush1.msra.mxu0 0.0
  %190 = vmatprep.subr.mxu0 0.0
  %191 = vmatpush1.msra.mxu0 0.0
  %192 = vmatprep.subr.mxu0 0.0
  %193 = vmatpush1.msra.mxu0 0.0
  %194 = vmatprep.subr.mxu0 0.0
  %195 = vmatpush1.msra.mxu0 0.0
  %196 = vmatprep.subr.mxu0 0.0
  %197 = vmatpush1.msra.mxu0 0.0
  %198 = vmatprep.subr.mxu0 0.0
  %199 = vmatpush1.msra.mxu0 0.0
  %200 = vmatprep.subr.mxu0 0.0
  %201 = vmatpush1.msra.mxu0 0.0
  %202 = vmatprep.subr.mxu0 0.0
  %203 = vmatpush1.msra.mxu0 0.0
  %204 = vmatprep.subr.mxu0 0.0
  %205 = vmatpush1.msra.mxu0 0.0
  %206 = vmatprep.mubr.f32.mxu0 0.0
  %207 = vmatmul.mubr.f32.gmra.mrb[0].mxu0 %v137
  %v208 = vpop.f32.mrb[0].mxu0
  %v209 = vadd.f32 %v129, %v208
  %v210 = vpop.f32.mrb[0].mxu0
  %211 = vmatprep.mubr.f32.mxu0 0.0
  %212 = vmatmul.mubr.f32.gmra.mrb[0].mxu0 %v140
  %v213 = vpop.f32.mrb[0].mxu0
  %v214 = vadd.f32 %v134, %v213
  %v215 = vpop.f32.mrb[0].mxu0
  %216 = vdwg.mxu0
  %v217 = vmax.f32 %v209, 0.0
  %v218 = vmax.f32 %v214, 0.0
  %s219 = scalar_lea.vmem %s1, 32
  %v220 = vld [vmem:[%s219] sm:$0xff]
  %v221 = vld [vmem:[%s219 + $0x8] sm:$0xff]
  %s222 = scalar_lea.vmem %s2, 32
  %v223 = vld [vmem:[%s222] sm:$0xff]
  %v224 = vld [vmem:[%s222 + $0x8] sm:$0xff]
  %226 = vset.pattern.permute.xlu0 0
  %227 = vperm.xlu0 %226, %v223
  %v228 = vpop.permute.xlu0 %227
  %231 = vset.pattern.permute.xlu0 0
  %232 = vperm.xlu0 %231, %v224
  %v233 = vpop.permute.xlu0 %232
  %v236 = vsel %vm36, %v220, 0
  %v239 = vsel %vm36, %v221, 0
  %241 = vmatprep.subr.mxu0 0.0
  %242 = vmatpush1.msra.mxu0 %v217
  %243 = vmatprep.subr.mxu0 0.0
  %244 = vmatpush1.msra.mxu0 %v218
  %245 = vmatprep.subr.mxu0 0.0
  %246 = vmatpush1.msra.mxu0 0.0
  %247 = vmatprep.subr.mxu0 0.0
  %248 = vmatpush1.msra.mxu0 0.0
  %249 = vmatprep.subr.mxu0 0.0
  %250 = vmatpush1.msra.mxu0 0.0
  %251 = vmatprep.subr.mxu0 0.0
  %252 = vmatpush1.msra.mxu0 0.0
  %253 = vmatprep.subr.mxu0 0.0
  %254 = vmatpush1.msra.mxu0 0.0
  %255 = vmatprep.subr.mxu0 0.0
  %256 = vmatpush1.msra.mxu0 0.0
  %257 = vmatprep.subr.mxu0 0.0
  %258 = vmatpush1.msra.mxu0 0.0
  %259 = vmatprep.subr.mxu0 0.0
  %260 = vmatpush1.msra.mxu0 0.0
  %261 = vmatprep.subr.mxu0 0.0
  %262 = vmatpush1.msra.mxu0 0.0
  %263 = vmatprep.subr.mxu0 0.0
  %264 = vmatpush1.msra.mxu0 0.0
  %265 = vmatprep.subr.mxu0 0.0
  %266 = vmatpush1.msra.mxu0 0.0
  %267 = vmatprep.subr.mxu0 0.0
  %268 = vmatpush1.msra.mxu0 0.0
  %269 = vmatprep.subr.mxu0 0.0
  %270 = vmatpush1.msra.mxu0 0.0
  %271 = vmatprep.subr.mxu0 0.0
  %272 = vmatpush1.msra.mxu0 0.0
  %273 = vmatprep.subr.mxu0 0.0
  %274 = vmatpush1.msra.mxu0 0.0
  %275 = vmatprep.subr.mxu0 0.0
  %276 = vmatpush1.msra.mxu0 0.0
  %277 = vmatprep.subr.mxu0 0.0
  %278 = vmatpush1.msra.mxu0 0.0
  %279 = vmatprep.subr.mxu0 0.0
  %280 = vmatpush1.msra.mxu0 0.0
  %281 = vmatprep.subr.mxu0 0.0
  %282 = vmatpush1.msra.mxu0 0.0
  %283 = vmatprep.subr.mxu0 0.0
  %284 = vmatpush1.msra.mxu0 0.0
  %285 = vmatprep.subr.mxu0 0.0
  %286 = vmatpush1.msra.mxu0 0.0
  %287 = vmatprep.subr.mxu0 0.0
  %288 = vmatpush1.msra.mxu0 0.0
  %289 = vmatprep.subr.mxu0 0.0
  %290 = vmatpush1.msra.mxu0 0.0
  %291 = vmatprep.subr.mxu0 0.0
  %292 = vmatpush1.msra.mxu0 0.0
  %293 = vmatprep.subr.mxu0 0.0
  %294 = vmatpush1.msra.mxu0 0.0
  %295 = vmatprep.subr.mxu0 0.0
  %296 = vmatpush1.msra.mxu0 0.0
  %297 = vmatprep.subr.mxu0 0.0
  %298 = vmatpush1.msra.mxu0 0.0
  %299 = vmatprep.subr.mxu0 0.0
  %300 = vmatpush1.msra.mxu0 0.0
  %301 = vmatprep.subr.mxu0 0.0
  %302 = vmatpush1.msra.mxu0 0.0
  %303 = vmatprep.subr.mxu0 0.0
  %304 = vmatpush1.msra.mxu0 0.0
  %305 = vmatprep.mubr.f32.mxu0 0.0
  %306 = vmatmul.mubr.f32.gmra.mrb[0].mxu0 %v236
  %v307 = vpop.f32.mrb[0].mxu0
  %v308 = vadd.f32 %v228, %v307
  %v309 = vpop.f32.mrb[0].mxu0
  %310 = vmatprep.mubr.f32.mxu0 0.0
  %311 = vmatmul.mubr.f32.gmra.mrb[0].mxu0 %v239
  %v312 = vpop.f32.mrb[0].mxu0
  %v313 = vadd.f32 %v233, %v312
  %v314 = vpop.f32.mrb[0].mxu0
  %315 = vdwg.mxu0
  %v316 = vmax.f32 %v308, 0.0
  %v317 = vmax.f32 %v313, 0.0
  %s318 = scalar_lea.vmem %s1, 48
  %v319 = vld [vmem:[%s318] sm:$0xff]
  %v320 = vld [vmem:[%s318 + $0x8] sm:$0xff]
  %s321 = scalar_lea.vmem %s2, 48
  %v322 = vld [vmem:[%s321] sm:$0xff]
  %v323 = vld [vmem:[%s321 + $0x8] sm:$0xff]
  %325 = vset.pattern.permute.xlu0 0
  %326 = vperm.xlu0 %325, %v322
  %v327 = vpop.permute.xlu0 %326
  %330 = vset.pattern.permute.xlu0 0
  %331 = vperm.xlu0 %330, %v323
  %v332 = vpop.permute.xlu0 %331
  %v335 = vsel %vm36, %v319, 0
  %v338 = vsel %vm36, %v320, 0
  %340 = vmatprep.subr.mxu0 0.0
  %341 = vmatpush1.msra.mxu0 %v316
  %342 = vmatprep.subr.mxu0 0.0
  %343 = vmatpush1.msra.mxu0 %v317
  %344 = vmatprep.subr.mxu0 0.0
  %345 = vmatpush1.msra.mxu0 0.0
  %346 = vmatprep.subr.mxu0 0.0
  %347 = vmatpush1.msra.mxu0 0.0
  %348 = vmatprep.subr.mxu0 0.0
  %349 = vmatpush1.msra.mxu0 0.0
  %350 = vmatprep.subr.mxu0 0.0
  %351 = vmatpush1.msra.mxu0 0.0
  %352 = vmatprep.subr.mxu0 0.0
  %353 = vmatpush1.msra.mxu0 0.0
  %354 = vmatprep.subr.mxu0 0.0
  %355 = vmatpush1.msra.mxu0 0.0
  %356 = vmatprep.subr.mxu0 0.0
  %357 = vmatpush1.msra.mxu0 0.0
  %358 = vmatprep.subr.mxu0 0.0
  %359 = vmatpush1.msra.mxu0 0.0
  %360 = vmatprep.subr.mxu0 0.0
  %361 = vmatpush1.msra.mxu0 0.0
  %362 = vmatprep.subr.mxu0 0.0
  %363 = vmatpush1.msra.mxu0 0.0
  %364 = vmatprep.subr.mxu0 0.0
  %365 = vmatpush1.msra.mxu0 0.0
  %366 = vmatprep.subr.mxu0 0.0
  %367 = vmatpush1.msra.mxu0 0.0
  %368 = vmatprep.subr.mxu0 0.0
  %369 = vmatpush1.msra.mxu0 0.0
  %370 = vmatprep.subr.mxu0 0.0
  %371 = vmatpush1.msra.mxu0 0.0
  %372 = vmatprep.subr.mxu0 0.0
  %373 = vmatpush1.msra.mxu0 0.0
  %374 = vmatprep.subr.mxu0 0.0
  %375 = vmatpush1.msra.mxu0 0.0
  %376 = vmatprep.subr.mxu0 0.0
  %377 = vmatpush1.msra.mxu0 0.0
  %378 = vmatprep.subr.mxu0 0.0
  %379 = vmatpush1.msra.mxu0 0.0
  %380 = vmatprep.subr.mxu0 0.0
  %381 = vmatpush1.msra.mxu0 0.0
  %382 = vmatprep.subr.mxu0 0.0
  %383 = vmatpush1.msra.mxu0 0.0
  %384 = vmatprep.subr.mxu0 0.0
  %385 = vmatpush1.msra.mxu0 0.0
  %386 = vmatprep.subr.mxu0 0.0
  %387 = vmatpush1.msra.mxu0 0.0
  %388 = vmatprep.subr.mxu0 0.0
  %389 = vmatpush1.msra.mxu0 0.0
  %390 = vmatprep.subr.mxu0 0.0
  %391 = vmatpush1.msra.mxu0 0.0
  %392 = vmatprep.subr.mxu0 0.0
  %393 = vmatpush1.msra.mxu0 0.0
  %394 = vmatprep.subr.mxu0 0.0
  %395 = vmatpush1.msra.mxu0 0.0
  %396 = vmatprep.subr.mxu0 0.0
  %397 = vmatpush1.msra.mxu0 0.0
  %398 = vmatprep.subr.mxu0 0.0
  %399 = vmatpush1.msra.mxu0 0.0
  %400 = vmatprep.subr.mxu0 0.0
  %401 = vmatpush1.msra.mxu0 0.0
  %402 = vmatprep.subr.mxu0 0.0
  %403 = vmatpush1.msra.mxu0 0.0
  %404 = vmatprep.mubr.f32.mxu0 0.0
  %405 = vmatmul.mubr.f32.gmra.mrb[0].mxu0 %v335
  %v406 = vpop.f32.mrb[0].mxu0
  %v407 = vadd.f32 %v327, %v406
  %v408 = vpop.f32.mrb[0].mxu0
  %409 = vmatprep.mubr.f32.mxu0 0.0
  %410 = vmatmul.mubr.f32.gmra.mrb[0].mxu0 %v338
  %v411 = vpop.f32.mrb[0].mxu0
  %v412 = vadd.f32 %v332, %v411
  %v413 = vpop.f32.mrb[0].mxu0
  %414 = vdwg.mxu0
  %v415 = vmax.f32 %v407, 0.0
  %v416 = vmax.f32 %v412, 0.0
  %s417 = scalar_lea.vmem %s1, 64
  %v418 = vld [vmem:[%s417] sm:$0xff]
  %v419 = vld [vmem:[%s417 + $0x8] sm:$0xff]
  %s420 = scalar_lea.vmem %s2, 64
  %v421 = vld [vmem:[%s420] sm:$0xff]
  %v422 = vld [vmem:[%s420 + $0x8] sm:$0xff]
  %424 = vset.pattern.permute.xlu0 0
  %425 = vperm.xlu0 %424, %v421
  %v426 = vpop.permute.xlu0 %425
  %429 = vset.pattern.permute.xlu0 0
  %430 = vperm.xlu0 %429, %v422
  %v431 = vpop.permute.xlu0 %430
  %v434 = vsel %vm36, %v418, 0
  %v437 = vsel %vm36, %v419, 0
  %439 = vmatprep.subr.mxu0 0.0
  %440 = vmatpush1.msra.mxu0 %v415
  %441 = vmatprep.subr.mxu0 0.0
  %442 = vmatpush1.msra.mxu0 %v416
  %443 = vmatprep.subr.mxu0 0.0
  %444 = vmatpush1.msra.mxu0 0.0
  %445 = vmatprep.subr.mxu0 0.0
  %446 = vmatpush1.msra.mxu0 0.0
  %447 = vmatprep.subr.mxu0 0.0
  %448 = vmatpush1.msra.mxu0 0.0
  %449 = vmatprep.subr.mxu0 0.0
  %450 = vmatpush1.msra.mxu0 0.0
  %451 = vmatprep.subr.mxu0 0.0
  %452 = vmatpush1.msra.mxu0 0.0
  %453 = vmatprep.subr.mxu0 0.0
  %454 = vmatpush1.msra.mxu0 0.0
  %455 = vmatprep.subr.mxu0 0.0
  %456 = vmatpush1.msra.mxu0 0.0
  %457 = vmatprep.subr.mxu0 0.0
  %458 = vmatpush1.msra.mxu0 0.0
  %459 = vmatprep.subr.mxu0 0.0
  %460 = vmatpush1.msra.mxu0 0.0
  %461 = vmatprep.subr.mxu0 0.0
  %462 = vmatpush1.msra.mxu0 0.0
  %463 = vmatprep.subr.mxu0 0.0
  %464 = vmatpush1.msra.mxu0 0.0
  %465 = vmatprep.subr.mxu0 0.0
  %466 = vmatpush1.msra.mxu0 0.0
  %467 = vmatprep.subr.mxu0 0.0
  %468 = vmatpush1.msra.mxu0 0.0
  %469 = vmatprep.subr.mxu0 0.0
  %470 = vmatpush1.msra.mxu0 0.0
  %471 = vmatprep.subr.mxu0 0.0
  %472 = vmatpush1.msra.mxu0 0.0
  %473 = vmatprep.subr.mxu0 0.0
  %474 = vmatpush1.msra.mxu0 0.0
  %475 = vmatprep.subr.mxu0 0.0
  %476 = vmatpush1.msra.mxu0 0.0
  %477 = vmatprep.subr.mxu0 0.0
  %478 = vmatpush1.msra.mxu0 0.0
  %479 = vmatprep.subr.mxu0 0.0
  %480 = vmatpush1.msra.mxu0 0.0
  %481 = vmatprep.subr.mxu0 0.0
  %482 = vmatpush1.msra.mxu0 0.0
  %483 = vmatprep.subr.mxu0 0.0
  %484 = vmatpush1.msra.mxu0 0.0
  %485 = vmatprep.subr.mxu0 0.0
  %486 = vmatpush1.msra.mxu0 0.0
  %487 = vmatprep.subr.mxu0 0.0
  %488 = vmatpush1.msra.mxu0 0.0
  %489 = vmatprep.subr.mxu0 0.0
  %490 = vmatpush1.msra.mxu0 0.0
  %491 = vmatprep.subr.mxu0 0.0
  %492 = vmatpush1.msra.mxu0 0.0
  %493 = vmatprep.subr.mxu0 0.0
  %494 = vmatpush1.msra.mxu0 0.0
  %495 = vmatprep.subr.mxu0 0.0
  %496 = vmatpush1.msra.mxu0 0.0
  %497 = vmatprep.subr.mxu0 0.0
  %498 = vmatpush1.msra.mxu0 0.0
  %499 = vmatprep.subr.mxu0 0.0
  %500 = vmatpush1.msra.mxu0 0.0
  %501 = vmatprep.subr.mxu0 0.0
  %502 = vmatpush1.msra.mxu0 0.0
  %503 = vmatprep.mubr.f32.mxu0 0.0
  %504 = vmatmul.mubr.f32.gmra.mrb[0].mxu0 %v434
  %v505 = vpop.f32.mrb[0].mxu0
  %v506 = vadd.f32 %v426, %v505
  %v507 = vpop.f32.mrb[0].mxu0
  %508 = vmatprep.mubr.f32.mxu0 0.0
  %509 = vmatmul.mubr.f32.gmra.mrb[0].mxu0 %v437
  %v510 = vpop.f32.mrb[0].mxu0
  %v511 = vadd.f32 %v431, %v510
  %v512 = vpop.f32.mrb[0].mxu0
  %513 = vdwg.mxu0
  %v514 = vmax.f32 %v506, 0.0
  %v515 = vmax.f32 %v511, 0.0
  %s516 = scalar_lea.vmem %s1, 80
  %v517 = vld [vmem:[%s516] sm:$0xff]
  %v518 = vld [vmem:[%s516 + $0x8] sm:$0xff]
  %s519 = scalar_lea.vmem %s2, 80
  %v520 = vld [vmem:[%s519] sm:$0xff]
  %v521 = vld [vmem:[%s519 + $0x8] sm:$0xff]
  %523 = vset.pattern.permute.xlu0 0
  %524 = vperm.xlu0 %523, %v520
  %v525 = vpop.permute.xlu0 %524
  %528 = vset.pattern.permute.xlu0 0
  %529 = vperm.xlu0 %528, %v521
  %v530 = vpop.permute.xlu0 %529
  %v533 = vsel %vm36, %v517, 0
  %v536 = vsel %vm36, %v518, 0
  %538 = vmatprep.subr.mxu0 0.0
  %539 = vmatpush1.msra.mxu0 %v514
  %540 = vmatprep.subr.mxu0 0.0
  %541 = vmatpush1.msra.mxu0 %v515
  %542 = vmatprep.subr.mxu0 0.0
  %543 = vmatpush1.msra.mxu0 0.0
  %544 = vmatprep.subr.mxu0 0.0
  %545 = vmatpush1.msra.mxu0 0.0
  %546 = vmatprep.subr.mxu0 0.0
  %547 = vmatpush1.msra.mxu0 0.0
  %548 = vmatprep.subr.mxu0 0.0
  %549 = vmatpush1.msra.mxu0 0.0
  %550 = vmatprep.subr.mxu0 0.0
  %551 = vmatpush1.msra.mxu0 0.0
  %552 = vmatprep.subr.mxu0 0.0
  %553 = vmatpush1.msra.mxu0 0.0
  %554 = vmatprep.subr.mxu0 0.0
  %555 = vmatpush1.msra.mxu0 0.0
  %556 = vmatprep.subr.mxu0 0.0
  %557 = vmatpush1.msra.mxu0 0.0
  %558 = vmatprep.subr.mxu0 0.0
  %559 = vmatpush1.msra.mxu0 0.0
  %560 = vmatprep.subr.mxu0 0.0
  %561 = vmatpush1.msra.mxu0 0.0
  %562 = vmatprep.subr.mxu0 0.0
  %563 = vmatpush1.msra.mxu0 0.0
  %564 = vmatprep.subr.mxu0 0.0
  %565 = vmatpush1.msra.mxu0 0.0
  %566 = vmatprep.subr.mxu0 0.0
  %567 = vmatpush1.msra.mxu0 0.0
  %568 = vmatprep.subr.mxu0 0.0
  %569 = vmatpush1.msra.mxu0 0.0
  %570 = vmatprep.subr.mxu0 0.0
  %571 = vmatpush1.msra.mxu0 0.0
  %572 = vmatprep.subr.mxu0 0.0
  %573 = vmatpush1.msra.mxu0 0.0
  %574 = vmatprep.subr.mxu0 0.0
  %575 = vmatpush1.msra.mxu0 0.0
  %576 = vmatprep.subr.mxu0 0.0
  %577 = vmatpush1.msra.mxu0 0.0
  %578 = vmatprep.subr.mxu0 0.0
  %579 = vmatpush1.msra.mxu0 0.0
  %580 = vmatprep.subr.mxu0 0.0
  %581 = vmatpush1.msra.mxu0 0.0
  %582 = vmatprep.subr.mxu0 0.0
  %583 = vmatpush1.msra.mxu0 0.0
  %584 = vmatprep.subr.mxu0 0.0
  %585 = vmatpush1.msra.mxu0 0.0
  %586 = vmatprep.subr.mxu0 0.0
  %587 = vmatpush1.msra.mxu0 0.0
  %588 = vmatprep.subr.mxu0 0.0
  %589 = vmatpush1.msra.mxu0 0.0
  %590 = vmatprep.subr.mxu0 0.0
  %591 = vmatpush1.msra.mxu0 0.0
  %592 = vmatprep.subr.mxu0 0.0
  %593 = vmatpush1.msra.mxu0 0.0
  %594 = vmatprep.subr.mxu0 0.0
  %595 = vmatpush1.msra.mxu0 0.0
  %596 = vmatprep.subr.mxu0 0.0
  %597 = vmatpush1.msra.mxu0 0.0
  %598 = vmatprep.subr.mxu0 0.0
  %599 = vmatpush1.msra.mxu0 0.0
  %600 = vmatprep.subr.mxu0 0.0
  %601 = vmatpush1.msra.mxu0 0.0
  %602 = vmatprep.mubr.f32.mxu0 0.0
  %603 = vmatmul.mubr.f32.gmra.mrb[0].mxu0 %v533
  %v604 = vpop.f32.mrb[0].mxu0
  %v605 = vadd.f32 %v525, %v604
  %v606 = vpop.f32.mrb[0].mxu0
  %607 = vmatprep.mubr.f32.mxu0 0.0
  %608 = vmatmul.mubr.f32.gmra.mrb[0].mxu0 %v536
  %v609 = vpop.f32.mrb[0].mxu0
  %v610 = vadd.f32 %v530, %v609
  %v611 = vpop.f32.mrb[0].mxu0
  %612 = vdwg.mxu0
  %v613 = vmax.f32 %v605, 0.0
  %v614 = vmax.f32 %v610, 0.0
  %s615 = scalar_lea.vmem %s1, 96
  %v616 = vld [vmem:[%s615] sm:$0xff]
  %v617 = vld [vmem:[%s615 + $0x8] sm:$0xff]
  %s618 = scalar_lea.vmem %s2, 96
  %v619 = vld [vmem:[%s618] sm:$0xff]
  %v620 = vld [vmem:[%s618 + $0x8] sm:$0xff]
  %622 = vset.pattern.permute.xlu0 0
  %623 = vperm.xlu0 %622, %v619
  %v624 = vpop.permute.xlu0 %623
  %627 = vset.pattern.permute.xlu0 0
  %628 = vperm.xlu0 %627, %v620
  %v629 = vpop.permute.xlu0 %628
  %v632 = vsel %vm36, %v616, 0
  %v635 = vsel %vm36, %v617, 0
  %637 = vmatprep.subr.mxu0 0.0
  %638 = vmatpush1.msra.mxu0 %v613
  %639 = vmatprep.subr.mxu0 0.0
  %640 = vmatpush1.msra.mxu0 %v614
  %641 = vmatprep.subr.mxu0 0.0
  %642 = vmatpush1.msra.mxu0 0.0
  %643 = vmatprep.subr.mxu0 0.0
  %644 = vmatpush1.msra.mxu0 0.0
  %645 = vmatprep.subr.mxu0 0.0
  %646 = vmatpush1.msra.mxu0 0.0
  %647 = vmatprep.subr.mxu0 0.0
  %648 = vmatpush1.msra.mxu0 0.0
  %649 = vmatprep.subr.mxu0 0.0
  %650 = vmatpush1.msra.mxu0 0.0
  %651 = vmatprep.subr.mxu0 0.0
  %652 = vmatpush1.msra.mxu0 0.0
  %653 = vmatprep.subr.mxu0 0.0
  %654 = vmatpush1.msra.mxu0 0.0
  %655 = vmatprep.subr.mxu0 0.0
  %656 = vmatpush1.msra.mxu0 0.0
  %657 = vmatprep.subr.mxu0 0.0
  %658 = vmatpush1.msra.mxu0 0.0
  %659 = vmatprep.subr.mxu0 0.0
  %660 = vmatpush1.msra.mxu0 0.0
  %661 = vmatprep.subr.mxu0 0.0
  %662 = vmatpush1.msra.mxu0 0.0
  %663 = vmatprep.subr.mxu0 0.0
  %664 = vmatpush1.msra.mxu0 0.0
  %665 = vmatprep.subr.mxu0 0.0
  %666 = vmatpush1.msra.mxu0 0.0
  %667 = vmatprep.subr.mxu0 0.0
  %668 = vmatpush1.msra.mxu0 0.0
  %669 = vmatprep.subr.mxu0 0.0
  %670 = vmatpush1.msra.mxu0 0.0
  %671 = vmatprep.subr.mxu0 0.0
  %672 = vmatpush1.msra.mxu0 0.0
  %673 = vmatprep.subr.mxu0 0.0
  %674 = vmatpush1.msra.mxu0 0.0
  %675 = vmatprep.subr.mxu0 0.0
  %676 = vmatpush1.msra.mxu0 0.0
  %677 = vmatprep.subr.mxu0 0.0
  %678 = vmatpush1.msra.mxu0 0.0
  %679 = vmatprep.subr.mxu0 0.0
  %680 = vmatpush1.msra.mxu0 0.0
  %681 = vmatprep.subr.mxu0 0.0
  %682 = vmatpush1.msra.mxu0 0.0
  %683 = vmatprep.subr.mxu0 0.0
  %684 = vmatpush1.msra.mxu0 0.0
  %685 = vmatprep.subr.mxu0 0.0
  %686 = vmatpush1.msra.mxu0 0.0
  %687 = vmatprep.subr.mxu0 0.0
  %688 = vmatpush1.msra.mxu0 0.0
  %689 = vmatprep.subr.mxu0 0.0
  %690 = vmatpush1.msra.mxu0 0.0
  %691 = vmatprep.subr.mxu0 0.0
  %692 = vmatpush1.msra.mxu0 0.0
  %693 = vmatprep.subr.mxu0 0.0
  %694 = vmatpush1.msra.mxu0 0.0
  %695 = vmatprep.subr.mxu0 0.0
  %696 = vmatpush1.msra.mxu0 0.0
  %697 = vmatprep.subr.mxu0 0.0
  %698 = vmatpush1.msra.mxu0 0.0
  %699 = vmatprep.subr.mxu0 0.0
  %700 = vmatpush1.msra.mxu0 0.0
  %701 = vmatprep.mubr.f32.mxu0 0.0
  %702 = vmatmul.mubr.f32.gmra.mrb[0].mxu0 %v632
  %v703 = vpop.f32.mrb[0].mxu0
  %v704 = vadd.f32 %v624, %v703
  %v705 = vpop.f32.mrb[0].mxu0
  %706 = vmatprep.mubr.f32.mxu0 0.0
  %707 = vmatmul.mubr.f32.gmra.mrb[0].mxu0 %v635
  %v708 = vpop.f32.mrb[0].mxu0
  %v709 = vadd.f32 %v629, %v708
  %v710 = vpop.f32.mrb[0].mxu0
  %711 = vdwg.mxu0
  %v712 = vmax.f32 %v704, 0.0
  %v713 = vmax.f32 %v709, 0.0
  %s714 = scalar_lea.vmem %s1, 112
  %v715 = vld [vmem:[%s714] sm:$0xff]
  %v716 = vld [vmem:[%s714 + $0x8] sm:$0xff]
  %s717 = scalar_lea.vmem %s2, 112
  %v718 = vld [vmem:[%s717] sm:$0xff]
  %v719 = vld [vmem:[%s717 + $0x8] sm:$0xff]
  %721 = vset.pattern.permute.xlu0 0
  %722 = vperm.xlu0 %721, %v718
  %v723 = vpop.permute.xlu0 %722
  %726 = vset.pattern.permute.xlu0 0
  %727 = vperm.xlu0 %726, %v719
  %v728 = vpop.permute.xlu0 %727
  %v731 = vsel %vm36, %v715, 0
  %v734 = vsel %vm36, %v716, 0
  %736 = vmatprep.subr.mxu0 0.0
  %737 = vmatpush1.msra.mxu0 %v712
  %738 = vmatprep.subr.mxu0 0.0
  %739 = vmatpush1.msra.mxu0 %v713
  %740 = vmatprep.subr.mxu0 0.0
  %741 = vmatpush1.msra.mxu0 0.0
  %742 = vmatprep.subr.mxu0 0.0
  %743 = vmatpush1.msra.mxu0 0.0
  %744 = vmatprep.subr.mxu0 0.0
  %745 = vmatpush1.msra.mxu0 0.0
  %746 = vmatprep.subr.mxu0 0.0
  %747 = vmatpush1.msra.mxu0 0.0
  %748 = vmatprep.subr.mxu0 0.0
  %749 = vmatpush1.msra.mxu0 0.0
  %750 = vmatprep.subr.mxu0 0.0
  %751 = vmatpush1.msra.mxu0 0.0
  %752 = vmatprep.subr.mxu0 0.0
  %753 = vmatpush1.msra.mxu0 0.0
  %754 = vmatprep.subr.mxu0 0.0
  %755 = vmatpush1.msra.mxu0 0.0
  %756 = vmatprep.subr.mxu0 0.0
  %757 = vmatpush1.msra.mxu0 0.0
  %758 = vmatprep.subr.mxu0 0.0
  %759 = vmatpush1.msra.mxu0 0.0
  %760 = vmatprep.subr.mxu0 0.0
  %761 = vmatpush1.msra.mxu0 0.0
  %762 = vmatprep.subr.mxu0 0.0
  %763 = vmatpush1.msra.mxu0 0.0
  %764 = vmatprep.subr.mxu0 0.0
  %765 = vmatpush1.msra.mxu0 0.0
  %766 = vmatprep.subr.mxu0 0.0
  %767 = vmatpush1.msra.mxu0 0.0
  %768 = vmatprep.subr.mxu0 0.0
  %769 = vmatpush1.msra.mxu0 0.0
  %770 = vmatprep.subr.mxu0 0.0
  %771 = vmatpush1.msra.mxu0 0.0
  %772 = vmatprep.subr.mxu0 0.0
  %773 = vmatpush1.msra.mxu0 0.0
  %774 = vmatprep.subr.mxu0 0.0
  %775 = vmatpush1.msra.mxu0 0.0
  %776 = vmatprep.subr.mxu0 0.0
  %777 = vmatpush1.msra.mxu0 0.0
  %778 = vmatprep.subr.mxu0 0.0
  %779 = vmatpush1.msra.mxu0 0.0
  %780 = vmatprep.subr.mxu0 0.0
  %781 = vmatpush1.msra.mxu0 0.0
  %782 = vmatprep.subr.mxu0 0.0
  %783 = vmatpush1.msra.mxu0 0.0
  %784 = vmatprep.subr.mxu0 0.0
  %785 = vmatpush1.msra.mxu0 0.0
  %786 = vmatprep.subr.mxu0 0.0
  %787 = vmatpush1.msra.mxu0 0.0
  %788 = vmatprep.subr.mxu0 0.0
  %789 = vmatpush1.msra.mxu0 0.0
  %790 = vmatprep.subr.mxu0 0.0
  %791 = vmatpush1.msra.mxu0 0.0
  %792 = vmatprep.subr.mxu0 0.0
  %793 = vmatpush1.msra.mxu0 0.0
  %794 = vmatprep.subr.mxu0 0.0
  %795 = vmatpush1.msra.mxu0 0.0
  %796 = vmatprep.subr.mxu0 0.0
  %797 = vmatpush1.msra.mxu0 0.0
  %798 = vmatprep.subr.mxu0 0.0
  %799 = vmatpush1.msra.mxu0 0.0
  %800 = vmatprep.mubr.f32.mxu0 0.0
  %801 = vmatmul.mubr.f32.gmra.mrb[0].mxu0 %v731
  %v802 = vpop.f32.mrb[0].mxu0
  %v803 = vadd.f32 %v723, %v802
  %v804 = vpop.f32.mrb[0].mxu0
  %805 = vmatprep.mubr.f32.mxu0 0.0
  %806 = vmatmul.mubr.f32.gmra.mrb[0].mxu0 %v734
  %v807 = vpop.f32.mrb[0].mxu0
  %v808 = vadd.f32 %v728, %v807
  %v809 = vpop.f32.mrb[0].mxu0
  %810 = vdwg.mxu0
  %v811 = vmax.f32 %v803, 0.0
  %v812 = vmax.f32 %v808, 0.0
  %s813 = scalar_lea.vmem %s1, 128
  %v814 = vld [vmem:[%s813] sm:$0xff]
  %v815 = vld [vmem:[%s813 + $0x8] sm:$0xff]
  %s816 = scalar_lea.vmem %s2, 128
  %v817 = vld [vmem:[%s816] sm:$0xff]
  %v818 = vld [vmem:[%s816 + $0x8] sm:$0xff]
  %820 = vset.pattern.permute.xlu0 0
  %821 = vperm.xlu0 %820, %v817
  %v822 = vpop.permute.xlu0 %821
  %825 = vset.pattern.permute.xlu0 0
  %826 = vperm.xlu0 %825, %v818
  %v827 = vpop.permute.xlu0 %826
  %v830 = vsel %vm36, %v814, 0
  %v833 = vsel %vm36, %v815, 0
  %835 = vmatprep.subr.mxu0 0.0
  %836 = vmatpush1.msra.mxu0 %v811
  %837 = vmatprep.subr.mxu0 0.0
  %838 = vmatpush1.msra.mxu0 %v812
  %839 = vmatprep.subr.mxu0 0.0
  %840 = vmatpush1.msra.mxu0 0.0
  %841 = vmatprep.subr.mxu0 0.0
  %842 = vmatpush1.msra.mxu0 0.0
  %843 = vmatprep.subr.mxu0 0.0
  %844 = vmatpush1.msra.mxu0 0.0
  %845 = vmatprep.subr.mxu0 0.0
  %846 = vmatpush1.msra.mxu0 0.0
  %847 = vmatprep.subr.mxu0 0.0
  %848 = vmatpush1.msra.mxu0 0.0
  %849 = vmatprep.subr.mxu0 0.0
  %850 = vmatpush1.msra.mxu0 0.0
  %851 = vmatprep.subr.mxu0 0.0
  %852 = vmatpush1.msra.mxu0 0.0
  %853 = vmatprep.subr.mxu0 0.0
  %854 = vmatpush1.msra.mxu0 0.0
  %855 = vmatprep.subr.mxu0 0.0
  %856 = vmatpush1.msra.mxu0 0.0
  %857 = vmatprep.subr.mxu0 0.0
  %858 = vmatpush1.msra.mxu0 0.0
  %859 = vmatprep.subr.mxu0 0.0
  %860 = vmatpush1.msra.mxu0 0.0
  %861 = vmatprep.subr.mxu0 0.0
  %862 = vmatpush1.msra.mxu0 0.0
  %863 = vmatprep.subr.mxu0 0.0
  %864 = vmatpush1.msra.mxu0 0.0
  %865 = vmatprep.subr.mxu0 0.0
  %866 = vmatpush1.msra.mxu0 0.0
  %867 = vmatprep.subr.mxu0 0.0
  %868 = vmatpush1.msra.mxu0 0.0
  %869 = vmatprep.subr.mxu0 0.0
  %870 = vmatpush1.msra.mxu0 0.0
  %871 = vmatprep.subr.mxu0 0.0
  %872 = vmatpush1.msra.mxu0 0.0
  %873 = vmatprep.subr.mxu0 0.0
  %874 = vmatpush1.msra.mxu0 0.0
  %875 = vmatprep.subr.mxu0 0.0
  %876 = vmatpush1.msra.mxu0 0.0
  %877 = vmatprep.subr.mxu0 0.0
  %878 = vmatpush1.msra.mxu0 0.0
  %879 = vmatprep.subr.mxu0 0.0
  %880 = vmatpush1.msra.mxu0 0.0
  %881 = vmatprep.subr.mxu0 0.0
  %882 = vmatpush1.msra.mxu0 0.0
  %883 = vmatprep.subr.mxu0 0.0
  %884 = vmatpush1.msra.mxu0 0.0
  %885 = vmatprep.subr.mxu0 0.0
  %886 = vmatpush1.msra.mxu0 0.0
  %887 = vmatprep.subr.mxu0 0.0
  %888 = vmatpush1.msra.mxu0 0.0
  %889 = vmatprep.subr.mxu0 0.0
  %890 = vmatpush1.msra.mxu0 0.0
  %891 = vmatprep.subr.mxu0 0.0
  %892 = vmatpush1.msra.mxu0 0.0
  %893 = vmatprep.subr.mxu0 0.0
  %894 = vmatpush1.msra.mxu0 0.0
  %895 = vmatprep.subr.mxu0 0.0
  %896 = vmatpush1.msra.mxu0 0.0
  %897 = vmatprep.subr.mxu0 0.0
  %898 = vmatpush1.msra.mxu0 0.0
  %899 = vmatprep.mubr.f32.mxu0 0.0
  %900 = vmatmul.mubr.f32.gmra.mrb[0].mxu0 %v830
  %v901 = vpop.f32.mrb[0].mxu0
  %v902 = vadd.f32 %v822, %v901
  %v903 = vpop.f32.mrb[0].mxu0
  %904 = vmatprep.mubr.f32.mxu0 0.0
  %905 = vmatmul.mubr.f32.gmra.mrb[0].mxu0 %v833
  %v906 = vpop.f32.mrb[0].mxu0
  %v907 = vadd.f32 %v827, %v906
  %v908 = vpop.f32.mrb[0].mxu0
  %909 = vdwg.mxu0
  %v910 = vmax.f32 %v902, 0.0
  %v911 = vmax.f32 %v907, 0.0
  %s912 = scalar_lea.vmem %s1, 144
  %v913 = vld [vmem:[%s912] sm:$0xff]
  %v914 = vld [vmem:[%s912 + $0x8] sm:$0xff]
  %s915 = scalar_lea.vmem %s2, 144
  %v916 = vld [vmem:[%s915] sm:$0xff]
  %v917 = vld [vmem:[%s915 + $0x8] sm:$0xff]
  %919 = vset.pattern.permute.xlu0 0
  %920 = vperm.xlu0 %919, %v916
  %v921 = vpop.permute.xlu0 %920
  %924 = vset.pattern.permute.xlu0 0
  %925 = vperm.xlu0 %924, %v917
  %v926 = vpop.permute.xlu0 %925
  %v929 = vsel %vm36, %v913, 0
  %v932 = vsel %vm36, %v914, 0
  %934 = vmatprep.subr.mxu0 0.0
  %935 = vmatpush1.msra.mxu0 %v910
  %936 = vmatprep.subr.mxu0 0.0
  %937 = vmatpush1.msra.mxu0 %v911
  %938 = vmatprep.subr.mxu0 0.0
  %939 = vmatpush1.msra.mxu0 0.0
  %940 = vmatprep.subr.mxu0 0.0
  %941 = vmatpush1.msra.mxu0 0.0
  %942 = vmatprep.subr.mxu0 0.0
  %943 = vmatpush1.msra.mxu0 0.0
  %944 = vmatprep.subr.mxu0 0.0
  %945 = vmatpush1.msra.mxu0 0.0
  %946 = vmatprep.subr.mxu0 0.0
  %947 = vmatpush1.msra.mxu0 0.0
  %948 = vmatprep.subr.mxu0 0.0
  %949 = vmatpush1.msra.mxu0 0.0
  %950 = vmatprep.subr.mxu0 0.0
  %951 = vmatpush1.msra.mxu0 0.0
  %952 = vmatprep.subr.mxu0 0.0
  %953 = vmatpush1.msra.mxu0 0.0
  %954 = vmatprep.subr.mxu0 0.0
  %955 = vmatpush1.msra.mxu0 0.0
  %956 = vmatprep.subr.mxu0 0.0
  %957 = vmatpush1.msra.mxu0 0.0
  %958 = vmatprep.subr.mxu0 0.0
  %959 = vmatpush1.msra.mxu0 0.0
  %960 = vmatprep.subr.mxu0 0.0
  %961 = vmatpush1.msra.mxu0 0.0
  %962 = vmatprep.subr.mxu0 0.0
  %963 = vmatpush1.msra.mxu0 0.0
  %964 = vmatprep.subr.mxu0 0.0
  %965 = vmatpush1.msra.mxu0 0.0
  %966 = vmatprep.subr.mxu0 0.0
  %967 = vmatpush1.msra.mxu0 0.0
  %968 = vmatprep.subr.mxu0 0.0
  %969 = vmatpush1.msra.mxu0 0.0
  %970 = vmatprep.subr.mxu0 0.0
  %971 = vmatpush1.msra.mxu0 0.0
  %972 = vmatprep.subr.mxu0 0.0
  %973 = vmatpush1.msra.mxu0 0.0
  %974 = vmatprep.subr.mxu0 0.0
  %975 = vmatpush1.msra.mxu0 0.0
  %976 = vmatprep.subr.mxu0 0.0
  %977 = vmatpush1.msra.mxu0 0.0
  %978 = vmatprep.subr.mxu0 0.0
  %979 = vmatpush1.msra.mxu0 0.0
  %980 = vmatprep.subr.mxu0 0.0
  %981 = vmatpush1.msra.mxu0 0.0
  %982 = vmatprep.subr.mxu0 0.0
  %983 = vmatpush1.msra.mxu0 0.0
  %984 = vmatprep.subr.mxu0 0.0
  %985 = vmatpush1.msra.mxu0 0.0
  %986 = vmatprep.subr.mxu0 0.0
  %987 = vmatpush1.msra.mxu0 0.0
  %988 = vmatprep.subr.mxu0 0.0
  %989 = vmatpush1.msra.mxu0 0.0
  %990 = vmatprep.subr.mxu0 0.0
  %991 = vmatpush1.msra.mxu0 0.0
  %992 = vmatprep.subr.mxu0 0.0
  %993 = vmatpush1.msra.mxu0 0.0
  %994 = vmatprep.subr.mxu0 0.0
  %995 = vmatpush1.msra.mxu0 0.0
  %996 = vmatprep.subr.mxu0 0.0
  %997 = vmatpush1.msra.mxu0 0.0
  %998 = vmatprep.mubr.f32.mxu0 0.0
  %999 = vmatmul.mubr.f32.gmra.mrb[0].mxu0 %v929
  %v1000 = vpop.f32.mrb[0].mxu0
  %v1001 = vadd.f32 %v921, %v1000
  %v1002 = vpop.f32.mrb[0].mxu0
  %1003 = vmatprep.mubr.f32.mxu0 0.0
  %1004 = vmatmul.mubr.f32.gmra.mrb[0].mxu0 %v932
  %v1005 = vpop.f32.mrb[0].mxu0
  %v1006 = vadd.f32 %v926, %v1005
  %v1007 = vpop.f32.mrb[0].mxu0
  %1008 = vdwg.mxu0
  %v1009 = vmax.f32 %v1001, 0.0
  %v1010 = vmax.f32 %v1006, 0.0
  %v1011 = vld [vmem:[%s3] sm:$0xff]
  %v1012 = vld [vmem:[%s4] sm:$0xff]
  %1014 = vset.pattern.permute.xlu0 0
  %1015 = vperm.xlu0 %1014, %v1012
  %v1016 = vpop.permute.xlu0 %1015
  %v1019 = vsel %vm36, %v1011, 0
  %1021 = vmatprep.subr.mxu0 0.0
  %1022 = vmatpush1.msra.mxu0 %v1009
  %1023 = vmatprep.subr.mxu0 0.0
  %1024 = vmatpush1.msra.mxu0 %v1010
  %1025 = vmatprep.subr.mxu0 0.0
  %1026 = vmatpush1.msra.mxu0 0.0
  %1027 = vmatprep.subr.mxu0 0.0
  %1028 = vmatpush1.msra.mxu0 0.0
  %1029 = vmatprep.subr.mxu0 0.0
  %1030 = vmatpush1.msra.mxu0 0.0
  %1031 = vmatprep.subr.mxu0 0.0
  %1032 = vmatpush1.msra.mxu0 0.0
  %1033 = vmatprep.subr.mxu0 0.0
  %1034 = vmatpush1.msra.mxu0 0.0
  %1035 = vmatprep.subr.mxu0 0.0
  %1036 = vmatpush1.msra.mxu0 0.0
  %1037 = vmatprep.subr.mxu0 0.0
  %1038 = vmatpush1.msra.mxu0 0.0
  %1039 = vmatprep.subr.mxu0 0.0
  %1040 = vmatpush1.msra.mxu0 0.0
  %1041 = vmatprep.subr.mxu0 0.0
  %1042 = vmatpush1.msra.mxu0 0.0
  %1043 = vmatprep.subr.mxu0 0.0
  %1044 = vmatpush1.msra.mxu0 0.0
  %1045 = vmatprep.subr.mxu0 0.0
  %1046 = vmatpush1.msra.mxu0 0.0
  %1047 = vmatprep.subr.mxu0 0.0
  %1048 = vmatpush1.msra.mxu0 0.0
  %1049 = vmatprep.subr.mxu0 0.0
  %1050 = vmatpush1.msra.mxu0 0.0
  %1051 = vmatprep.subr.mxu0 0.0
  %1052 = vmatpush1.msra.mxu0 0.0
  %1053 = vmatprep.subr.mxu0 0.0
  %1054 = vmatpush1.msra.mxu0 0.0
  %1055 = vmatprep.subr.mxu0 0.0
  %1056 = vmatpush1.msra.mxu0 0.0
  %1057 = vmatprep.subr.mxu0 0.0
  %1058 = vmatpush1.msra.mxu0 0.0
  %1059 = vmatprep.subr.mxu0 0.0
  %1060 = vmatpush1.msra.mxu0 0.0
  %1061 = vmatprep.subr.mxu0 0.0
  %1062 = vmatpush1.msra.mxu0 0.0
  %1063 = vmatprep.subr.mxu0 0.0
  %1064 = vmatpush1.msra.mxu0 0.0
  %1065 = vmatprep.subr.mxu0 0.0
  %1066 = vmatpush1.msra.mxu0 0.0
  %1067 = vmatprep.subr.mxu0 0.0
  %1068 = vmatpush1.msra.mxu0 0.0
  %1069 = vmatprep.subr.mxu0 0.0
  %1070 = vmatpush1.msra.mxu0 0.0
  %1071 = vmatprep.subr.mxu0 0.0
  %1072 = vmatpush1.msra.mxu0 0.0
  %1073 = vmatprep.subr.mxu0 0.0
  %1074 = vmatpush1.msra.mxu0 0.0
  %1075 = vmatprep.subr.mxu0 0.0
  %1076 = vmatpush1.msra.mxu0 0.0
  %1077 = vmatprep.subr.mxu0 0.0
  %1078 = vmatpush1.msra.mxu0 0.0
  %1079 = vmatprep.subr.mxu0 0.0
  %1080 = vmatpush1.msra.mxu0 0.0
  %1081 = vmatprep.subr.mxu0 0.0
  %1082 = vmatpush1.msra.mxu0 0.0
  %1083 = vmatprep.subr.mxu0 0.0
  %1084 = vmatpush1.msra.mxu0 0.0
  %1085 = vmatprep.mubr.f32.mxu0 0.0
  %1086 = vmatmul.mubr.f32.gmra.mrb[0].mxu0 %v1019
  %v1087 = vpop.f32.mrb[0].mxu0
  %v1088 = vadd.f32 %v1016, %v1087
  %v1089 = vpop.f32.mrb[0].mxu0
  %1090 = vdwg.mxu0
  %1091 = vst [vmem:[%s5] sm:$0xff] %v1088
  // Predicated region
  $region22: #{neural_network_forward.1} parent=0 // pred_check
    _
  $region23: #{neural_network_forward.1} parent=0 // pred_check_branch
    %1093 = sbr.rel (0) target = $region25
  $region24: #{neural_network_forward.1} parent=0 // pred_region
    _
  $region25: #{neural_network_forward.1} parent=0 // pred_fallthru
    _
  // Predicated region
  $region26: #{neural_network_forward.1} parent=0 // pred_check
    _
  $region27: #{neural_network_forward.1} parent=0 // pred_check_branch
    %1095 = sbr.rel (0) target = $region29
  $region28: #{neural_network_forward.1} parent=0 // pred_region
    _
  $region29: #{neural_network_forward.1} parent=0 // pred_fallthru
    _

</llo_original>
